<compile_context>
chip_gen: v7x
topology: tpu7x:2x2x1
jax: 0.10.0
libtpu: 0.0.40
codegen_flags: <defaults>
</compile_context>

<pallas_src>
import math

import jax
import jax.numpy as jnp
from jax.experimental import pallas as pl
from jax.experimental.pallas import tpu as pltpu


def _round_up(x: int, m: int) -> int:
    return (x + m - 1) // m * m


def _attention_kernel(qw_ref, v_ref, idx_ref, out_ref, m_sc, l_sc, acc_sc):
    t = pl.program_id(0)

    @pl.when(t == 0)
    def _init():
        m_sc[...] = jnp.full_like(m_sc, -1e30)
        l_sc[...] = jnp.zeros_like(l_sc)
        acc_sc[...] = jnp.zeros_like(acc_sc)

    qw = qw_ref[...]          # [Bp, E]   (query @ W / sqrt(D), precomputed)
    v = v_ref[...]            # [tile_n, E]  current node tile (f32 or bf16)
    idx = idx_ref[...]        # [1, tile_n]  graph id per node (-1 = padding)

    # att[b, j] = <qw[b], v[j]>  — contract the E axes directly (no v.T).
    att = jax.lax.dot_general(
        qw, v,
        dimension_numbers=(((1,), (1,)), ((), ())),
        preferred_element_type=jnp.float32)            # [Bp, tile_n] f32

    b_iota = jax.lax.broadcasted_iota(jnp.int32, att.shape, 0)   # [Bp, tile_n]
    mask = idx == b_iota                                          # [Bp, tile_n]

    # Online (streaming) group-masked softmax.
    s = jnp.where(mask, att, jnp.float32(-1e30))
    m_prev = m_sc[...]                                            # [Bp, 1]
    m_new = jnp.maximum(m_prev, jnp.max(s, axis=-1, keepdims=True))
    alpha = jnp.exp(m_prev - m_new)                               # [Bp, 1]
    e = jnp.where(mask, jnp.exp(s - m_new), jnp.float32(0.0))     # [Bp, tile_n]

    l_sc[...] = alpha * l_sc[...] + jnp.sum(e, axis=-1, keepdims=True)
    acc_sc[...] = alpha * acc_sc[...] + jnp.dot(
        e.astype(v.dtype), v, preferred_element_type=jnp.float32)
    m_sc[...] = m_new

    @pl.when(t == pl.num_programs(0) - 1)
    def _finalize():
        l = l_sc[...]
        inv = pl.reciprocal(jnp.where(l > 0, l, jnp.float32(1.0)), approx=True)
        out_ref[...] = (acc_sc[...] * inv).astype(out_ref.dtype)


def attention_pallas(query, W, values, index, *, tile_n: int = 512):
    """Forward pass of the Attention module as a tiled Pallas TPU kernel."""
    B, D = query.shape
    N, E = values.shape
    v_dtype = values.dtype

    # Hoist q @ W once and fold in the 1/sqrt(D) scale ([B, E] is tiny).
    qw = (query.astype(jnp.float32) @ W.astype(jnp.float32)) * jnp.float32(
        1.0 / math.sqrt(D))

    # Pad batch to the sublane granule (8). Padded rows never match `index`,
    # so they remain zero and are sliced off at the end.
    b_pad = _round_up(max(B, 1), 8)
    qw = jnp.zeros((b_pad, E), jnp.float32).at[:B].set(qw)
    if v_dtype == jnp.bfloat16:            # keep MXU operand dtypes matched
        qw = qw.astype(jnp.bfloat16)

    # Node-axis tiling: tile_n a multiple of 128, clamped to padded N.
    tile_n = max(128, _round_up(min(tile_n, _round_up(N, 128)), 128))
    n_pad = _round_up(N, tile_n)
    v_p = jnp.zeros((n_pad, E), v_dtype).at[:N].set(values)
    idx_p = jnp.full((1, n_pad), -1, jnp.int32).at[0, :N].set(
        index.astype(jnp.int32))
    n_tiles = n_pad // tile_n

    # Scoped-VMEM budget: double-buffered values + index tiles, small residents.
    e_lane = _round_up(E, 128)
    est = (2 * tile_n * e_lane * jnp.dtype(v_dtype).itemsize   # values (2 bufs)
           + 2 * 8 * tile_n * 4                                # index  (2 bufs)
           + 8 * b_pad * e_lane * 4)                           # qw/out/acc/m/l
    vmem_limit = int(min(max(4 * est, 16 * 1024 * 1024), 32 * 1024 * 1024))

    out = pl.pallas_call(
        _attention_kernel,
        out_shape=jax.ShapeDtypeStruct((b_pad, E), jnp.float32),
        grid=(n_tiles,),
        in_specs=[
            pl.BlockSpec((b_pad, E), lambda t: (0, 0)),    # qw (resident)
            pl.BlockSpec((tile_n, E), lambda t: (t, 0)),   # values tile (stream)
            pl.BlockSpec((1, tile_n), lambda t: (0, t)),   # index tile (stream)
        ],
        out_specs=pl.BlockSpec((b_pad, E), lambda t: (0, 0)),
        scratch_shapes=[
            pltpu.VMEM((b_pad, 1), jnp.float32),   # running max  m
            pltpu.VMEM((b_pad, 1), jnp.float32),   # running denom l
            pltpu.VMEM((b_pad, E), jnp.float32),   # running acc
        ],
        compiler_params=pltpu.CompilerParams(
            dimension_semantics=("arbitrary",),
            vmem_limit_bytes=vmem_limit),
    )(qw, v_p, idx_p)

    return out[:B]


def attention_reference(query, W, values, index):
    """Pure-JAX reference mirroring the PyTorch forward."""
    B, D = query.shape
    att = (query @ (W @ values.T)) / jnp.sqrt(jnp.float32(D))     # [B, N]
    mask = index[None, :] == jnp.arange(B)[:, None]
    s = jnp.where(mask, att, -jnp.inf)
    m = jnp.max(s, axis=-1, keepdims=True)
    e = jnp.where(mask, jnp.exp(s - m), 0.0)
    p = e / jnp.maximum(jnp.sum(e, axis=-1, keepdims=True), 1e-30)
    w_node = jnp.sum(p, axis=0)                                    # [N]
    weighted = w_node[:, None] * values                            # [N, E]
    return jnp.zeros((B, values.shape[1]), jnp.float32).at[index].add(weighted)


if __name__ == "__main__":
    # Small shapes: 4 graphs, decoder_dim=16, encoder_dim=32, 512 nodes.
    # tile_n=128 -> 4 grid steps, exercising the online-softmax accumulator.
    B, D, E, N = 4, 16, 32, 512
    key = jax.random.PRNGKey(0)
    k_q, k_w, k_v, k_i = jax.random.split(key, 4)

    query = jax.random.normal(k_q, (B, D), jnp.float32)
    W = jax.random.uniform(k_w, (D, E), jnp.float32)      # mimics torch.rand init
    values = jax.random.normal(k_v, (N, E), jnp.float32)
    index = jax.random.permutation(k_i, jnp.arange(N, dtype=jnp.int32) % B)

    ref = attention_reference(query, W, values, index)

    # f32 streaming path.
    out = jax.block_until_ready(
        attention_pallas(query, W, values, index, tile_n=128))
    assert out.shape == (B, E)
    assert jnp.allclose(out, ref, atol=5e-3, rtol=5e-3), float(
        jnp.max(jnp.abs(out - ref)))

    # bf16-streamed values (halved HBM traffic on v6e/v7x); loose tolerance.
    out_bf16 = jax.block_until_ready(
        attention_pallas(query, W, values.astype(jnp.bfloat16), index, tile_n=128))
    assert out_bf16.shape == (B, E)
    assert jnp.allclose(out_bf16, ref, atol=1e-1, rtol=1e-1)

    print("KERNEL_OK")
</pallas_src>

<mosaic_0001>
module attributes {stable_mosaic.version = 11 : i64} {
  func.func @_attention_kernel(%arg0: i32, %arg1: memref<8x32xf32, #tpu.memory_space<vmem>>, %arg2: memref<128x32xf32, #tpu.memory_space<vmem>>, %arg3: memref<1x128xi32, #tpu.memory_space<vmem>>, %arg4: memref<8x32xf32, #tpu.memory_space<vmem>>, %arg5: memref<8x1xf32, #tpu.memory_space<vmem>>, %arg6: memref<8x1xf32, #tpu.memory_space<vmem>>, %arg7: memref<8x32xf32, #tpu.memory_space<vmem>>) attributes {dimension_semantics = [#tpu.dimension_semantics<arbitrary>], iteration_bounds = array<i64: 4>, scalar_prefetch = 0 : i64, scratch_operands = 3 : i64, tpu.core_type = #tpu.core_type<tc>, window_params = [{pipeline_mode = #tpu.pipeline_mode<synchronous>, transform_indices = @transform_0, window_bounds = array<i64: 8, 32>}, {transform_indices = @transform_1, window_bounds = array<i64: 128, 32>}, {transform_indices = @transform_2, window_bounds = array<i64: 1, 128>}, {pipeline_mode = #tpu.pipeline_mode<synchronous>, transform_indices = @transform_3, window_bounds = array<i64: 8, 32>}]} {
    %c0_i32 = arith.constant 0 : i32
    %0 = arith.cmpi eq, %arg0, %c0_i32 : i32
    %1 = arith.extui %0 : i1 to i32
    %c0_i32_0 = arith.constant 0 : i32
    %2 = arith.cmpi ne, %1, %c0_i32_0 : i32
    scf.if %2 {
      %cst_24 = arith.constant -1.000000e+30 : f32
      %39 = vector.broadcast %cst_24 : f32 to vector<8x1xf32>
      %c0_25 = arith.constant 0 : index
      %c0_26 = arith.constant 0 : index
      %40 = vector.load %arg5[%c0_25, %c0_26] : memref<8x1xf32, #tpu.memory_space<vmem>>, vector<8x1xf32>
      tpu.vector_store %arg5[%c0_25, %c0_26], %39 {strides = array<i32>} : memref<8x1xf32, #tpu.memory_space<vmem>>, vector<8x1xf32>,
      %cst_27 = arith.constant 0.000000e+00 : f32
      %41 = vector.broadcast %cst_27 : f32 to vector<8x1xf32>
      %c0_28 = arith.constant 0 : index
      %c0_29 = arith.constant 0 : index
      %42 = vector.load %arg6[%c0_28, %c0_29] : memref<8x1xf32, #tpu.memory_space<vmem>>, vector<8x1xf32>
      tpu.vector_store %arg6[%c0_28, %c0_29], %41 {strides = array<i32>} : memref<8x1xf32, #tpu.memory_space<vmem>>, vector<8x1xf32>,
      %cst_30 = arith.constant 0.000000e+00 : f32
      %43 = vector.broadcast %cst_30 : f32 to vector<8x32xf32>
      %c0_31 = arith.constant 0 : index
      %c0_32 = arith.constant 0 : index
      %44 = vector.load %arg7[%c0_31, %c0_32] : memref<8x32xf32, #tpu.memory_space<vmem>>, vector<8x32xf32>
      tpu.vector_store %arg7[%c0_31, %c0_32], %43 {strides = array<i32>} : memref<8x32xf32, #tpu.memory_space<vmem>>, vector<8x32xf32>,
    } else {
    }
    %c0 = arith.constant 0 : index
    %c0_1 = arith.constant 0 : index
    %3 = vector.load %arg1[%c0, %c0_1] : memref<8x32xf32, #tpu.memory_space<vmem>>, vector<8x32xf32>
    %c0_2 = arith.constant 0 : index
    %c0_3 = arith.constant 0 : index
    %4 = vector.load %arg2[%c0_2, %c0_3] : memref<128x32xf32, #tpu.memory_space<vmem>>, vector<128x32xf32>
    %c0_4 = arith.constant 0 : index
    %c0_5 = arith.constant 0 : index
    %5 = vector.load %arg3[%c0_4, %c0_5] : memref<1x128xi32, #tpu.memory_space<vmem>>, vector<1x128xi32>
    %cst = arith.constant dense<0.000000e+00> : vector<8x128xf32>
    %6 = tpu.matmul %3, %4, %cst {dimension_numbers = #tpu.dot_dimension_numbers<[1], [1], [0], [0], [0, 0, 1, 0], [], []>} : vector<8x32xf32>, vector<128x32xf32>, vector<8x128xf32> -> vector<8x128xf32>
    %7 = tpu.iota {dimensions = array<i32: 0>} : vector<8x128xi32>
    %8 = vector.broadcast %5 : vector<1x128xi32> to vector<8x128xi32>
    %9 = arith.cmpi eq, %8, %7 : vector<8x128xi32>
    %cst_6 = arith.constant -1.000000e+30 : f32
    %10 = vector.broadcast %cst_6 : f32 to vector<8x128xf32>
    %11 = arith.select %9, %6, %10 : vector<8x128xi1>, vector<8x128xf32>
    %c0_7 = arith.constant 0 : index
    %c0_8 = arith.constant 0 : index
    %12 = vector.load %arg5[%c0_7, %c0_8] : memref<8x1xf32, #tpu.memory_space<vmem>>, vector<8x1xf32>
    %cst_9 = arith.constant dense<0xFF800000> : vector<8xf32>
    %13 = vector.multi_reduction <maximumf>, %11, %cst_9 [1] : vector<8x128xf32> to vector<8xf32>
    %14 = vector.shape_cast %13 : vector<8xf32> to vector<8x1xf32>
    %15 = arith.maximumf %12, %14 : vector<8x1xf32>
    %16 = arith.subf %12, %15 : vector<8x1xf32>
    %17 = math.exp %16 : vector<8x1xf32>
    %18 = vector.broadcast %15 : vector<8x1xf32> to vector<8x128xf32>
    %19 = arith.subf %11, %18 : vector<8x128xf32>
    %20 = math.exp %19 : vector<8x128xf32>
    %cst_10 = arith.constant 0.000000e+00 : f32
    %21 = vector.broadcast %cst_10 : f32 to vector<8x128xf32>
    %22 = arith.select %9, %20, %21 : vector<8x128xi1>, vector<8x128xf32>
    %c0_11 = arith.constant 0 : index
    %c0_12 = arith.constant 0 : index
    %23 = vector.load %arg6[%c0_11, %c0_12] : memref<8x1xf32, #tpu.memory_space<vmem>>, vector<8x1xf32>
    %24 = arith.mulf %17, %23 : vector<8x1xf32>
    %cst_13 = arith.constant dense<0.000000e+00> : vector<8xf32>
    %25 = vector.multi_reduction <add>, %22, %cst_13 [1] : vector<8x128xf32> to vector<8xf32>
    %26 = vector.shape_cast %25 : vector<8xf32> to vector<8x1xf32>
    %27 = arith.addf %24, %26 : vector<8x1xf32>
    %c0_14 = arith.constant 0 : index
    %c0_15 = arith.constant 0 : index
    %28 = vector.load %arg6[%c0_14, %c0_15] : memref<8x1xf32, #tpu.memory_space<vmem>>, vector<8x1xf32>
    tpu.vector_store %arg6[%c0_14, %c0_15], %27 {strides = array<i32>} : memref<8x1xf32, #tpu.memory_space<vmem>>, vector<8x1xf32>,
    %c0_16 = arith.constant 0 : index
    %c0_17 = arith.constant 0 : index
    %29 = vector.load %arg7[%c0_16, %c0_17] : memref<8x32xf32, #tpu.memory_space<vmem>>, vector<8x32xf32>
    %30 = vector.broadcast %17 : vector<8x1xf32> to vector<8x32xf32>
    %31 = arith.mulf %30, %29 : vector<8x32xf32>
    %cst_18 = arith.constant dense<0.000000e+00> : vector<8x32xf32>
    %32 = tpu.matmul %22, %4, %cst_18 {dimension_numbers = #tpu.dot_dimension_numbers<[1], [0], [0], [1], [0, 0, 1, 1], [], []>} : vector<8x128xf32>, vector<128x32xf32>, vector<8x32xf32> -> vector<8x32xf32>
    %33 = arith.addf %31, %32 : vector<8x32xf32>
    %c0_19 = arith.constant 0 : index
    %c0_20 = arith.constant 0 : index
    %34 = vector.load %arg7[%c0_19, %c0_20] : memref<8x32xf32, #tpu.memory_space<vmem>>, vector<8x32xf32>
    tpu.vector_store %arg7[%c0_19, %c0_20], %33 {strides = array<i32>} : memref<8x32xf32, #tpu.memory_space<vmem>>, vector<8x32xf32>,
    %c0_21 = arith.constant 0 : index
    %c0_22 = arith.constant 0 : index
    %35 = vector.load %arg5[%c0_21, %c0_22] : memref<8x1xf32, #tpu.memory_space<vmem>>, vector<8x1xf32>
    tpu.vector_store %arg5[%c0_21, %c0_22], %15 {strides = array<i32>} : memref<8x1xf32, #tpu.memory_space<vmem>>, vector<8x1xf32>,
    %c3_i32 = arith.constant 3 : i32
    %36 = arith.cmpi eq, %arg0, %c3_i32 : i32
    %37 = arith.extui %36 : i1 to i32
    %c0_i32_23 = arith.constant 0 : i32
    %38 = arith.cmpi ne, %37, %c0_i32_23 : i32
    scf.if %38 {
      %c0_24 = arith.constant 0 : index
      %c0_25 = arith.constant 0 : index
      %39 = vector.load %arg6[%c0_24, %c0_25] : memref<8x1xf32, #tpu.memory_space<vmem>>, vector<8x1xf32>
      %cst_26 = arith.constant 0.000000e+00 : f32
      %40 = vector.broadcast %cst_26 : f32 to vector<8x1xf32>
      %41 = arith.cmpf ogt, %39, %40 : vector<8x1xf32>
      %cst_27 = arith.constant 1.000000e+00 : f32
      %42 = vector.broadcast %cst_27 : f32 to vector<8x1xf32>
      %43 = arith.select %41, %39, %42 : vector<8x1xi1>, vector<8x1xf32>
      %44 = tpu.reciprocal %43 {approx = true} : vector<8x1xf32> -> vector<8x1xf32>
      %c0_28 = arith.constant 0 : index
      %c0_29 = arith.constant 0 : index
      %45 = vector.load %arg7[%c0_28, %c0_29] : memref<8x32xf32, #tpu.memory_space<vmem>>, vector<8x32xf32>
      %46 = vector.broadcast %44 : vector<8x1xf32> to vector<8x32xf32>
      %47 = arith.mulf %45, %46 : vector<8x32xf32>
      %c0_30 = arith.constant 0 : index
      %c0_31 = arith.constant 0 : index
      %48 = vector.load %arg4[%c0_30, %c0_31] : memref<8x32xf32, #tpu.memory_space<vmem>>, vector<8x32xf32>
      tpu.vector_store %arg4[%c0_30, %c0_31], %47 {strides = array<i32>} : memref<8x32xf32, #tpu.memory_space<vmem>>, vector<8x32xf32>,
    } else {
    }
    return
  }
  func.func @transform_0(%arg0: i32) -> (i32, i32) {
    %c0_i32 = arith.constant 0 : i32
    %c0_i32_0 = arith.constant 0 : i32
    %c0_i32_1 = arith.constant 0 : i32
    return %c0_i32, %c0_i32_0 : i32, i32
  }
  func.func @transform_1(%arg0: i32) -> (i32, i32) {
    %c0_i32 = arith.constant 0 : i32
    %c0_i32_0 = arith.constant 0 : i32
    return %arg0, %c0_i32 : i32, i32
  }
  func.func @transform_2(%arg0: i32) -> (i32, i32) {
    %c0_i32 = arith.constant 0 : i32
    %c0_i32_0 = arith.constant 0 : i32
    return %c0_i32, %arg0 : i32, i32
  }
  func.func @transform_3(%arg0: i32) -> (i32, i32) {
    %c0_i32 = arith.constant 0 : i32
    %c0_i32_0 = arith.constant 0 : i32
    %c0_i32_1 = arith.constant 0 : i32
    return %c0_i32, %c0_i32_0 : i32, i32
  }
}

</mosaic_0001>

<llo_original>
// kernel: tpu_custom_call.1
$region0: #{tpu_custom_call.1}
  #allocation0 [shape = 'u32[]', space=smem, size = 0x4, offset = 0x4, fixed_abs, tag = 'smem constant byte address 0x4 - core index']
  #allocation1 [shape = 'u32[144,128]{1,0:T(1,128)}', space=vmem, size = 0x12000, scoped, tag = 'internal scratch']
  #allocation2 [shape = 'f32[8,1]{1,0:T(8,128)}', space=vmem, size = 0x1000, scoped, tag = 'scratch operand']
  #allocation3 [shape = 'f32[8,1]{1,0:T(8,128)}', space=vmem, size = 0x1000, scoped, tag = 'scratch operand']
  #allocation4 [shape = 'f32[8,32]{1,0:T(8,128)}', space=vmem, size = 0x1000, scoped, tag = 'scratch operand']
  %s0 = inlined_call_operand.vmem [shape: f32[8,32], index: 0, kind: input, shape index: {}]
  %s1 = inlined_call_operand.vmem [shape: f32[512,32], index: 1, kind: input, shape index: {}]
  %s2 = inlined_call_operand.vmem [shape: s32[1,512], index: 2, kind: input, shape index: {}]
  %s3 = inlined_call_operand.hbm [shape: f32[8,32], index: 3, kind: output, shape index: {}]
  %s4 = sld [smem:[#allocation0]]
  $region53: #{tpu_custom_call.1} parent=0
    _
  %s6 = ssub.s32 1, %s4
  %s7 = scalar_select 0, %s6, %s4
  $region1: #{tpu_custom_call.1} parent=0
    #allocation5 [shape = 'u8[4096]{0}', space=vmem, size = 0x1000, scoped, tag = 'output window, operand 0, single buffered']
    #allocation6 [shape = 's32[2]{0}', space=sflag, size = 0x8, scoped, tag = 'scoped memory for tpu_custom_call.1']
    %8 = vsyncpa [#allocation6], 0
    loop: start=0, step=1, limit=6
    $region2: #{tpu_custom_call.1} parent=1 // loop_pre_header
      _
    $region3: #{tpu_custom_call.1} parent=1 // loop_header
      %s10 = sphi 0, %s14
      %p11 = scmp.ge.s32.totalorder %s10, 6
      %s18 = sphi 0, %s18
      %s20 = sphi 0, %s18
      %s21 = sphi 0, %s20
      %s35 = sphi 0, %s21
      %s41 = sphi 0, %s43
      %s44 = sphi 0, %s41
      %s45 = sphi 0, %s44
      %s61 = sphi 0, %s45
      %s67 = sphi 0, %s69
      %s70 = sphi 0, %s67
      %s71 = sphi 0, %s70
      %s87 = sphi 0, %s71
      %s91 = sphi 0, %s91
      %s93 = sphi 0, %s91
      %s94 = sphi 0, %s93
      %s108 = sphi 0, %s94
    $region4: #{tpu_custom_call.1} parent=1 // loop_header_branch
      %13 = sbr.rel (%p11) target = $region8
    $region5: #{tpu_custom_call.1} parent=1 // loop_body
      %s15 = ssub.s32 %s10, 1
      %s16 = ssub.s32 %s10, 2
      %s17 = sadd.s32 %s10, 1
      %s19 = sadd.s32 %s18, 1
      %p22 = scmp.eq.s32.totalorder %s10, 3
      %p23 = scmp.ne.s32.totalorder %s18, %s20
      %p24 = scmp.eq.s32.totalorder %s10, 0
      %p25 = por %p23, %p24
      %p26 = scmp.ne.s32.totalorder %s18, %s20
      %p27 = scmp.eq.s32.totalorder %s15, 3
      %p28 = por %p26, %p27
      %p29 = scmp.ne.s32.totalorder %s20, %s21
      %p30 = scmp.eq.s32.totalorder %s15, 0
      %p31 = por %p29, %p30
      %p32 = scmp.ne.s32.totalorder %s20, %s21
      %p33 = scmp.eq.s32.totalorder %s16, 3
      %p34 = por %p32, %p33
      %p36 = scmp.ne.s32.totalorder %s21, %s35
      %p37 = scmp.eq.s32.totalorder %s16, 0
      %p38 = por %p36, %p37
      %s39 = ssub.s32 %s10, %s17
      %p40 = scmp.eq.s32.totalorder %s39, 0
      %s42 = sadd.s32 %s41, 1
      %s43 = scalar_select %p40, %s41, %s42
      %p46 = pneg %p40
      %p47 = scmp.eq.s32.totalorder %s10, 3
      %p48 = por %p46, %p47
      %p49 = scmp.ne.s32.totalorder %s41, %s44
      %p50 = scmp.eq.s32.totalorder %s10, 0
      %p51 = por %p49, %p50
      %p52 = scmp.ne.s32.totalorder %s41, %s44
      %p53 = scmp.eq.s32.totalorder %s15, 3
      %p54 = por %p52, %p53
      %p55 = scmp.ne.s32.totalorder %s44, %s45
      %p56 = scmp.eq.s32.totalorder %s15, 0
      %p57 = por %p55, %p56
      %p58 = scmp.ne.s32.totalorder %s44, %s45
      %p59 = scmp.eq.s32.totalorder %s16, 3
      %p60 = por %p58, %p59
      %p62 = scmp.ne.s32.totalorder %s45, %s61
      %p63 = scmp.eq.s32.totalorder %s16, 0
      %p64 = por %p62, %p63
      %s65 = ssub.s32 %s10, %s17
      %p66 = scmp.eq.s32.totalorder %s65, 0
      %s68 = sadd.s32 %s67, 1
      %s69 = scalar_select %p66, %s67, %s68
      %p72 = pneg %p66
      %p73 = scmp.eq.s32.totalorder %s10, 3
      %p74 = por %p72, %p73
      %p75 = scmp.ne.s32.totalorder %s67, %s70
      %p76 = scmp.eq.s32.totalorder %s10, 0
      %p77 = por %p75, %p76
      %p78 = scmp.ne.s32.totalorder %s67, %s70
      %p79 = scmp.eq.s32.totalorder %s15, 3
      %p80 = por %p78, %p79
      %p81 = scmp.ne.s32.totalorder %s70, %s71
      %p82 = scmp.eq.s32.totalorder %s15, 0
      %p83 = por %p81, %p82
      %p84 = scmp.ne.s32.totalorder %s70, %s71
      %p85 = scmp.eq.s32.totalorder %s16, 3
      %p86 = por %p84, %p85
      %p88 = scmp.ne.s32.totalorder %s71, %s87
      %p89 = scmp.eq.s32.totalorder %s16, 0
      %p90 = por %p88, %p89
      %s92 = sadd.s32 %s91, 1
      %p95 = scmp.eq.s32.totalorder %s10, 3
      %p96 = scmp.ne.s32.totalorder %s91, %s93
      %p97 = scmp.eq.s32.totalorder %s10, 0
      %p98 = por %p96, %p97
      %p99 = scmp.ne.s32.totalorder %s91, %s93
      %p100 = scmp.eq.s32.totalorder %s15, 3
      %p101 = por %p99, %p100
      %p102 = scmp.ne.s32.totalorder %s93, %s94
      %p103 = scmp.eq.s32.totalorder %s15, 0
      %p104 = por %p102, %p103
      %p105 = scmp.ne.s32.totalorder %s93, %s94
      %p106 = scmp.eq.s32.totalorder %s16, 3
      %p107 = por %p105, %p106
      %p109 = scmp.ne.s32.totalorder %s94, %s108
      %p110 = scmp.eq.s32.totalorder %s16, 0
      %p111 = por %p109, %p110
      %p112 = scmp.le.s32.totalorder 1, %s10
      %p113 = scmp.lt.s32.totalorder %s10, 5
      %p114 = pnand %p112, %p113
      %p115 = pneg %p114
      // Predicated region
      $region9: #{tpu_custom_call.1} parent=5 // pred_check
        _
      $region10: #{tpu_custom_call.1} parent=5 // pred_check_branch
        %117 = sbr.rel (%p114) target = $region12
      $region11: #{tpu_custom_call.1} parent=5 // pred_region
        %s118 = ssub.s32 %s10, 1
        // Predicated region
        $region13: #{tpu_custom_call.1} parent=11 // pred_check
          %p119 = pneg %p31
        $region14: #{tpu_custom_call.1} parent=11 // pred_check_branch
          %121 = sbr.rel (%p119) target = $region16
        $region15: #{tpu_custom_call.1} parent=11 // pred_region
          _
        $region16: #{tpu_custom_call.1} parent=11 // pred_fallthru
          _
      $region12: #{tpu_custom_call.1} parent=5 // pred_fallthru
        _
      %p122 = scmp.lt.s32.totalorder %s10, 4
      // Predicated region
      $region17: #{tpu_custom_call.1} parent=5 // pred_check
        %p123 = pneg %p122
      $region18: #{tpu_custom_call.1} parent=5 // pred_check_branch
        %125 = sbr.rel (%p123) target = $region20
      $region19: #{tpu_custom_call.1} parent=5 // pred_region
        // Predicated region
        $region21: #{tpu_custom_call.1} parent=19 // pred_check
          %p126 = pneg %p51
        $region22: #{tpu_custom_call.1} parent=19 // pred_check_branch
          %128 = sbr.rel (%p126) target = $region24
        $region23: #{tpu_custom_call.1} parent=19 // pred_region
          %s129 = smul.u32 16, %s10
          %p130 = scmp.lt.s32.totalorder %s129, 63
          %s131 = scalar_select %p130, %s129, 63
          %s132 = smul.addr %s131, 8
          %s133 = scalar_lea.vmem %s1, %s132
          %s134 = smul.u32 16, %s10
        $region24: #{tpu_custom_call.1} parent=19 // pred_fallthru
          _
        // Predicated region
        $region25: #{tpu_custom_call.1} parent=19 // pred_check
          %p135 = pneg %p77
        $region26: #{tpu_custom_call.1} parent=19 // pred_check_branch
          %137 = sbr.rel (%p135) target = $region28
        $region27: #{tpu_custom_call.1} parent=19 // pred_region
          %p138 = scmp.lt.s32.totalorder %s10, 3
          %s139 = scalar_select %p138, %s10, 3
          %s140 = scalar_lea.vmem %s2, %s139
        $region28: #{tpu_custom_call.1} parent=19 // pred_fallthru
          _
      $region20: #{tpu_custom_call.1} parent=5 // pred_fallthru
        _
      %p141 = scmp.le.s32.totalorder 1, %s10
      %p142 = scmp.lt.s32.totalorder %s10, 5
      %p143 = pnand %p141, %p142
      %p144 = pneg %p143
      // Predicated region
      $region29: #{tpu_custom_call.1} parent=5 // pred_check
        _
      $region30: #{tpu_custom_call.1} parent=5 // pred_check_branch
        %146 = sbr.rel (%p143) target = $region32
      $region31: #{tpu_custom_call.1} parent=5 // pred_region
        %s147 = ssub.s32 %s10, 1
        %p148 = pneg %p31
        %p149 = pneg %p28
        %s150 = smul.u32 16, %s15
        %p151 = scmp.lt.s32.totalorder %s150, 63
        %s152 = scalar_select %p151, %s150, 63
        %s153 = smul.addr %s152, 8
        %s154 = scalar_lea.vmem %s1, %s153
        %p155 = pneg %p57
        %p156 = pneg %p54
        %p157 = scmp.lt.s32.totalorder %s15, 3
        %s158 = scalar_select %p157, %s15, 3
        %s159 = scalar_lea.vmem %s2, %s158
        %p160 = pneg %p83
        %p161 = pneg %p80
        %p162 = pneg %p104
        %p163 = pneg %p101
        %s164 = smul.u32 16, %s15
        %p165 = scmp.lt.s32.totalorder %s164, 63
        %s166 = scalar_select %p165, %s164, 63
        %s167 = smul.addr %s166, 8
        %s168 = scalar_lea.vmem %s1, %s167
        %s169 = smul.u32 16, %s15
        %p170 = scmp.lt.s32.totalorder %s15, 3
        %s171 = scalar_select %p170, %s15, 3
        %s172 = scalar_lea.vmem %s2, %s171
        %p173 = scmp.eq.s32.totalorder %s15, 0
        // Predicated region
        $region33: #{tpu_custom_call.1} parent=31 // pred_check
          %p174 = pneg %p173
        $region34: #{tpu_custom_call.1} parent=31 // pred_check_branch
          %176 = sbr.rel (%p174) target = $region36
        $region35: #{tpu_custom_call.1} parent=31 // pred_region
          %vm177 = vcmask 7168
          %178 = vst.msk [vmem:[#allocation2] sm:$0xff] %vm177, -1e+30
          %179 = vst.msk [vmem:[#allocation3] sm:$0xff] %vm177, 0.0
          %vm180 = vcmask 261120
          %181 = vst.msk [vmem:[#allocation4] sm:$0xff] %vm180, 0.0
        $region36: #{tpu_custom_call.1} parent=31 // pred_fallthru
          _
        %v182 = vld [vmem:[%s0] sm:$0xff]
        %v183 = vld [vmem:[%s168] sm:$0xff]
        %v184 = vld [vmem:[%s168 + $0x8] sm:$0xff]
        %v185 = vld [vmem:[%s168 + $0x10] sm:$0xff]
        %v186 = vld [vmem:[%s168 + $0x18] sm:$0xff]
        %v187 = vld [vmem:[%s168 + $0x20] sm:$0xff]
        %v188 = vld [vmem:[%s168 + $0x28] sm:$0xff]
        %v189 = vld [vmem:[%s168 + $0x30] sm:$0xff]
        %v190 = vld [vmem:[%s168 + $0x38] sm:$0xff]
        %v191 = vld [vmem:[%s168 + $0x40] sm:$0xff]
        %v192 = vld [vmem:[%s168 + $0x48] sm:$0xff]
        %v193 = vld [vmem:[%s168 + $0x50] sm:$0xff]
        %v194 = vld [vmem:[%s168 + $0x58] sm:$0xff]
        %v195 = vld [vmem:[%s168 + $0x60] sm:$0xff]
        %v196 = vld [vmem:[%s168 + $0x68] sm:$0xff]
        %v197 = vld [vmem:[%s168 + $0x70] sm:$0xff]
        %v198 = vld [vmem:[%s168 + $0x78] sm:$0xff]
        %v199 = vld [vmem:[%s172] sm:$0x1]
        %vm200 = vcmask 261120
        %v202 = vsel %vm200, %v182, 0
        %v205 = vsel %vm200, %v183, 0
        %v208 = vsel %vm200, %v184, 0
        %v211 = vsel %vm200, %v185, 0
        %v214 = vsel %vm200, %v186, 0
        %v217 = vsel %vm200, %v187, 0
        %v220 = vsel %vm200, %v188, 0
        %v223 = vsel %vm200, %v189, 0
        %v226 = vsel %vm200, %v190, 0
        %v229 = vsel %vm200, %v191, 0
        %v232 = vsel %vm200, %v192, 0
        %v235 = vsel %vm200, %v193, 0
        %v238 = vsel %vm200, %v194, 0
        %v241 = vsel %vm200, %v195, 0
        %v244 = vsel %vm200, %v196, 0
        %v247 = vsel %vm200, %v197, 0
        %v250 = vsel %vm200, %v198, 0
        %252 = vmatprep.subr.mxu0 0.0
        %253 = vmatpush1.xpose.msra.mxu0 %v205
        %254 = vmatprep.subr.mxu0 0.0
        %255 = vmatpush1.xpose.msra.mxu0 %v208
        %256 = vmatprep.subr.mxu0 0.0
        %257 = vmatpush1.xpose.msra.mxu0 %v211
        %258 = vmatprep.subr.mxu0 0.0
        %259 = vmatpush1.xpose.msra.mxu0 %v214
        %260 = vmatprep.subr.mxu0 0.0
        %261 = vmatpush1.xpose.msra.mxu0 %v217
        %262 = vmatprep.subr.mxu0 0.0
        %263 = vmatpush1.xpose.msra.mxu0 %v220
        %264 = vmatprep.subr.mxu0 0.0
        %265 = vmatpush1.xpose.msra.mxu0 %v223
        %266 = vmatprep.subr.mxu0 0.0
        %267 = vmatpush1.xpose.msra.mxu0 %v226
        %268 = vmatprep.subr.mxu0 0.0
        %269 = vmatpush1.xpose.msra.mxu0 %v229
        %270 = vmatprep.subr.mxu0 0.0
        %271 = vmatpush1.xpose.msra.mxu0 %v232
        %272 = vmatprep.subr.mxu0 0.0
        %273 = vmatpush1.xpose.msra.mxu0 %v235
        %274 = vmatprep.subr.mxu0 0.0
        %275 = vmatpush1.xpose.msra.mxu0 %v238
        %276 = vmatprep.subr.mxu0 0.0
        %277 = vmatpush1.xpose.msra.mxu0 %v241
        %278 = vmatprep.subr.mxu0 0.0
        %279 = vmatpush1.xpose.msra.mxu0 %v244
        %280 = vmatprep.subr.mxu0 0.0
        %281 = vmatpush1.xpose.msra.mxu0 %v247
        %282 = vmatprep.subr.mxu0 0.0
        %283 = vmatpush1.xpose.msra.mxu0 %v250
        %284 = vmatprep.subr.mxu0 0.0
        %285 = vmatpush1.xpose.msra.mxu0 0.0
        %286 = vmatprep.subr.mxu0 0.0
        %287 = vmatpush1.xpose.msra.mxu0 0.0
        %288 = vmatprep.subr.mxu0 0.0
        %289 = vmatpush1.xpose.msra.mxu0 0.0
        %290 = vmatprep.subr.mxu0 0.0
        %291 = vmatpush1.xpose.msra.mxu0 0.0
        %292 = vmatprep.subr.mxu0 0.0
        %293 = vmatpush1.xpose.msra.mxu0 0.0
        %294 = vmatprep.subr.mxu0 0.0
        %295 = vmatpush1.xpose.msra.mxu0 0.0
        %296 = vmatprep.subr.mxu0 0.0
        %297 = vmatpush1.xpose.msra.mxu0 0.0
        %298 = vmatprep.subr.mxu0 0.0
        %299 = vmatpush1.xpose.msra.mxu0 0.0
        %300 = vmatprep.subr.mxu0 0.0
        %301 = vmatpush1.xpose.msra.mxu0 0.0
        %302 = vmatprep.subr.mxu0 0.0
        %303 = vmatpush1.xpose.msra.mxu0 0.0
        %304 = vmatprep.subr.mxu0 0.0
        %305 = vmatpush1.xpose.msra.mxu0 0.0
        %306 = vmatprep.subr.mxu0 0.0
        %307 = vmatpush1.xpose.msra.mxu0 0.0
        %308 = vmatprep.subr.mxu0 0.0
        %309 = vmatpush1.xpose.msra.mxu0 0.0
        %310 = vmatprep.subr.mxu0 0.0
        %311 = vmatpush1.xpose.msra.mxu0 0.0
        %312 = vmatprep.subr.mxu0 0.0
        %313 = vmatpush1.xpose.msra.mxu0 0.0
        %314 = vmatprep.subr.mxu0 0.0
        %315 = vmatpush1.xpose.msra.mxu0 0.0
        %316 = vmatprep.mubr.f32.mxu0 0.0
        %317 = vmatmul.mubr.f32.gmra.mrb[0].mxu0 %v202
        %v318 = vpop.f32.mrb[0].mxu0
        %v319 = vadd.f32 0.0, %v318
        %v320 = vpop.f32.mrb[0].mxu0
        %321 = vdwg.mxu0
        %v322 = vlaneseq
        %v323 = vshrl.u32 %v322, 7
        %v324 = vlaneseq
        %v325 = vshrl.u32 %v324, 7
        %v326 = vsub.s32 0, %v325
        %v327 = vrot.slane %v199, %v326
        %vm328 = vcmp.eq.s32.totalorder %v327, %v323
        %v329 = vsel %vm328, %v319, -1e+30
        %v330 = vld [vmem:[#allocation2] sm:$0xff]
        %331 = vmax.xlane.f32.xlu0 %v329
        %v332 = vpop.xlane.xlu0 %331
        %v333 = vmax.f32 %v330, %v332
        %v334 = vsub.f32 %v330, %v333
        %v335 = vmul.f32 %v334, 1.442695
        %v336 = vpow.pop %v335
        %338 = vset.pattern.permute.xlu0 0
        %339 = vperm.xlu0 %338, %v333
        %v340 = vpop.permute.xlu0 %339
        %v342 = vsub.f32 %v329, %v340
        %v343 = vmul.f32 %v342, 1.442695
        %v344 = vpow.pop %v343
        %v345 = vsel %vm328, %v344, 0.0
        %v346 = vld [vmem:[#allocation3] sm:$0xff]
        %v347 = vmul.f32 %v336, %v346
        %348 = vadd.xlane.f32.xlu0 %v345
        %v349 = vpop.xlane.xlu0 %348
        %v350 = vadd.f32 %v347, %v349
        %vm351 = vcmask 7168
        %352 = vst.msk [vmem:[#allocation3] sm:$0xff] %vm351, %v350
        %v353 = vld [vmem:[#allocation4] sm:$0xff]
        %355 = vset.pattern.permute.xlu0 0
        %356 = vperm.xlu0 %355, %v336
        %v357 = vpop.permute.xlu0 %356
        %v359 = vmul.f32 %v357, %v353
        %360 = vmatprep.subr.mxu0 0.0
        %361 = vmatpush1.msra.mxu0 %v183
        %362 = vmatprep.subr.mxu0 0.0
        %363 = vmatpush1.msra.mxu0 %v184
        %364 = vmatprep.subr.mxu0 0.0
        %365 = vmatpush1.msra.mxu0 %v185
        %366 = vmatprep.subr.mxu0 0.0
        %367 = vmatpush1.msra.mxu0 %v186
        %368 = vmatprep.subr.mxu0 0.0
        %369 = vmatpush1.msra.mxu0 %v187
        %370 = vmatprep.subr.mxu0 0.0
        %371 = vmatpush1.msra.mxu0 %v188
        %372 = vmatprep.subr.mxu0 0.0
        %373 = vmatpush1.msra.mxu0 %v189
        %374 = vmatprep.subr.mxu0 0.0
        %375 = vmatpush1.msra.mxu0 %v190
        %376 = vmatprep.subr.mxu0 0.0
        %377 = vmatpush1.msra.mxu0 %v191
        %378 = vmatprep.subr.mxu0 0.0
        %379 = vmatpush1.msra.mxu0 %v192
        %380 = vmatprep.subr.mxu0 0.0
        %381 = vmatpush1.msra.mxu0 %v193
        %382 = vmatprep.subr.mxu0 0.0
        %383 = vmatpush1.msra.mxu0 %v194
        %384 = vmatprep.subr.mxu0 0.0
        %385 = vmatpush1.msra.mxu0 %v195
        %386 = vmatprep.subr.mxu0 0.0
        %387 = vmatpush1.msra.mxu0 %v196
        %388 = vmatprep.subr.mxu0 0.0
        %389 = vmatpush1.msra.mxu0 %v197
        %390 = vmatprep.subr.mxu0 0.0
        %391 = vmatpush1.msra.mxu0 %v198
        %392 = vmatprep.subr.mxu0 0.0
        %393 = vmatpush1.msra.mxu0 0.0
        %394 = vmatprep.subr.mxu0 0.0
        %395 = vmatpush1.msra.mxu0 0.0
        %396 = vmatprep.subr.mxu0 0.0
        %397 = vmatpush1.msra.mxu0 0.0
        %398 = vmatprep.subr.mxu0 0.0
        %399 = vmatpush1.msra.mxu0 0.0
        %400 = vmatprep.subr.mxu0 0.0
        %401 = vmatpush1.msra.mxu0 0.0
        %402 = vmatprep.subr.mxu0 0.0
        %403 = vmatpush1.msra.mxu0 0.0
        %404 = vmatprep.subr.mxu0 0.0
        %405 = vmatpush1.msra.mxu0 0.0
        %406 = vmatprep.subr.mxu0 0.0
        %407 = vmatpush1.msra.mxu0 0.0
        %408 = vmatprep.subr.mxu0 0.0
        %409 = vmatpush1.msra.mxu0 0.0
        %410 = vmatprep.subr.mxu0 0.0
        %411 = vmatpush1.msra.mxu0 0.0
        %412 = vmatprep.subr.mxu0 0.0
        %413 = vmatpush1.msra.mxu0 0.0
        %414 = vmatprep.subr.mxu0 0.0
        %415 = vmatpush1.msra.mxu0 0.0
        %416 = vmatprep.subr.mxu0 0.0
        %417 = vmatpush1.msra.mxu0 0.0
        %418 = vmatprep.subr.mxu0 0.0
        %419 = vmatpush1.msra.mxu0 0.0
        %420 = vmatprep.subr.mxu0 0.0
        %421 = vmatpush1.msra.mxu0 0.0
        %422 = vmatprep.subr.mxu0 0.0
        %423 = vmatpush1.msra.mxu0 0.0
        %424 = vmatprep.mubr.f32.mxu0 0.0
        %425 = vmatmul.mubr.f32.gmra.mrb[0].mxu0 %v345
        %v426 = vpop.f32.mrb[0].mxu0
        %v427 = vadd.f32 0.0, %v426
        %v428 = vpop.f32.mrb[0].mxu0
        %429 = vdwg.mxu0
        %v430 = vadd.f32 %v359, %v427
        %431 = vst.msk [vmem:[#allocation4] sm:$0xff] %vm200, %v430
        %432 = vst.msk [vmem:[#allocation2] sm:$0xff] %vm351, %v333
        %p433 = scmp.eq.s32.totalorder %s15, 3
        // Predicated region
        $region37: #{tpu_custom_call.1} parent=31 // pred_check
          %p434 = pneg %p433
        $region38: #{tpu_custom_call.1} parent=31 // pred_check_branch
          %436 = sbr.rel (%p434) target = $region40
        $region39: #{tpu_custom_call.1} parent=31 // pred_region
          %v437 = vld [vmem:[#allocation3] sm:$0xff]
          %vm438 = vcmp.gt.f32.partialorder %v437, 0.0
          %v439 = vsel %vm438, %v437, 1.0
          %v440 = vrcp.pop %v439
          %v441 = vld [vmem:[#allocation4] sm:$0xff]
          %443 = vset.pattern.permute.xlu0 0
          %444 = vperm.xlu0 %443, %v440
          %v445 = vpop.permute.xlu0 %444
          %v447 = vmul.f32 %v441, %v445
          %448 = vst.msk [vmem:[#allocation5] sm:$0xff] %vm200, %v447
        $region40: #{tpu_custom_call.1} parent=31 // pred_fallthru
          _
        // Predicated region
        $region41: #{tpu_custom_call.1} parent=31 // pred_check
          %p449 = pneg %p101
        $region42: #{tpu_custom_call.1} parent=31 // pred_check_branch
          %451 = sbr.rel (%p449) target = $region44
        $region43: #{tpu_custom_call.1} parent=31 // pred_region
          %s453 = ssub.s32 128, 128
          %454 = vsyncadd [#allocation6], %s453
          %s456 = sshll.u32 [#allocation5], 4
          %s457 = int_to_ptr.vmem [resolvable:$true] %s456
          %459 = dma.vmem_to_hbm [thread:$0]  %s457, 128, %s3, [#allocation6]
        $region44: #{tpu_custom_call.1} parent=31 // pred_fallthru
          _
        // Predicated region
        $region45: #{tpu_custom_call.1} parent=31 // pred_check
          %p460 = pneg %p101
        $region46: #{tpu_custom_call.1} parent=31 // pred_check_branch
          %462 = sbr.rel (%p460) target = $region48
        $region47: #{tpu_custom_call.1} parent=31 // pred_region
          %463 = dma.done [#allocation6], 128
        $region48: #{tpu_custom_call.1} parent=31 // pred_fallthru
          _
      $region32: #{tpu_custom_call.1} parent=5 // pred_fallthru
        _
      %p464 = scmp.le.s32.totalorder 2, %s10
      // Predicated region
      $region49: #{tpu_custom_call.1} parent=5 // pred_check
        %p465 = pneg %p464
      $region50: #{tpu_custom_call.1} parent=5 // pred_check_branch
        %467 = sbr.rel (%p465) target = $region52
      $region51: #{tpu_custom_call.1} parent=5 // pred_region
        %s468 = ssub.s32 %s10, 2
      $region52: #{tpu_custom_call.1} parent=5 // pred_fallthru
        _
    $region6: #{tpu_custom_call.1} parent=1 // loop_footer
      %s14 = sadd.s32 1, %s10
    $region7: #{tpu_custom_call.1} parent=1 // loop_footer_branch
      %9 = sbr.rel target = $region3
    $region8: #{tpu_custom_call.1} parent=1 // loop_exit
      _
    %469 = vsyncpa [#allocation6], 1
    %s470 = scalar_lea.sflag [#allocation6], 1
    %471 = vsyncpa %s470, 1

</llo_original>
